<compile_context>
chip_gen: v6e
topology: v6e:2x2x1
jax: 0.10.0
libtpu: 0.0.40
codegen_flags: <defaults>
</compile_context>

<pallas_src>
import functools

import numpy as np
import jax
import jax.numpy as jnp
from jax.experimental import pallas as pl
from jax.experimental.pallas import tpu as pltpu


# ----------------------------- irreps metadata ------------------------------

def irreps_metadata(irreps):
    """irreps: list of (mul, l, parity).  Returns dim, num_features,
    num_scalar, scalar_index, per-component feature index."""
    dim = 0
    num_features = 0
    scalar_index = []
    comp_feature = []  # feature (irrep copy) index of every component
    feat = 0
    for mul, l, p in irreps:
        d = 2 * l + 1
        if l == 0 and p == 1:
            scalar_index.extend(range(dim, dim + mul))
        for u in range(mul):
            comp_feature.extend([feat + u] * d)
        dim += mul * d
        feat += mul
        num_features += mul
    return (dim, num_features, len(scalar_index),
            np.array(scalar_index, np.int64), np.array(comp_feature, np.int64))


def _round_up_to(a, b):
    return ((a + b - 1) // b) * b


# ------------------------------- Pallas kernel ------------------------------

def _eqln_kernel(x_ref, smask_ref, w_ref, b_ref, o_ref, *,
                 inv_num_scalar, num_scalar, inv_num_features, eps):
    x = x_ref[...]                       # (tile_n, D) f32
    smask = smask_ref[...]               # (1, D) 0/1 mask of 0e scalar slots

    # Two independent row reductions on the raw input (issue back-to-back).
    s_scal = jnp.sum(x * smask, axis=-1, keepdims=True)   # sum of 0e scalars
    s_sq = jnp.sum(x * x, axis=-1, keepdims=True)          # sum of squares

    m = s_scal * inv_num_scalar                             # scalar mean
    # sum_j (x_j - m*smask_j)^2 == s_sq - num_scalar * m^2
    mean_sq = (s_sq - num_scalar * (m * m)) * inv_num_features
    inv_rms = jax.lax.rsqrt(mean_sq + eps)                  # EUP (free slot)

    # out = (x - m*smask) * inv_rms * w  + bias-on-scalar-slots
    o_ref[...] = (x - m * smask) * (inv_rms * w_ref[...]) + b_ref[...]


def equivariant_layer_norm(x, smask, w_exp, b_exp, *, num_features, num_scalar,
                           eps=1e-5, tile_n=8192,
                           vmem_limit_bytes=40 * 1024 * 1024):
    """x: (N, D) f32; smask/w_exp/b_exp: (1, D) f32 constants."""
    N, D = x.shape

    # Clamp the row tile to the problem size, keeping sublane (8) alignment.
    # D pads to 128 lanes in VMEM, so one f32 buffer is tile_n*128*4 B:
    # tile_n=8192 => 4 MiB/buffer, ~16 MiB for 2x in + 2x out double buffers.
    tile_n = max(8, min(tile_n, _round_up_to(N, 8)))
    # Ensure >= 2 "parallel" grid steps when possible so v7x's 2 TCs both work.
    if N > 8 and pl.cdiv(N, tile_n) < 2:
        tile_n = _round_up_to(pl.cdiv(N, 2), 8)
    grid = (pl.cdiv(N, tile_n),)   # partial last block is masked by Pallas

    kernel = functools.partial(
        _eqln_kernel,
        inv_num_scalar=(1.0 / float(num_scalar)) if num_scalar > 0 else 0.0,
        num_scalar=float(num_scalar),
        inv_num_features=1.0 / float(num_features),
        eps=float(eps))

    row_spec = pl.BlockSpec((tile_n, D), lambda i: (i, 0))
    const_spec = pl.BlockSpec((1, D), lambda i: (0, 0))   # constant: no re-DMA

    return pl.pallas_call(
        kernel,
        out_shape=jax.ShapeDtypeStruct((N, D), x.dtype),
        grid=grid,
        in_specs=[row_spec, const_spec, const_spec, const_spec],
        out_specs=pl.BlockSpec((tile_n, D), lambda i: (i, 0)),
        compiler_params=pltpu.CompilerParams(
            dimension_semantics=("parallel",),
            vmem_limit_bytes=vmem_limit_bytes),
    )(x, smask, w_exp, b_exp)


# ---------------------- host-side parameter expansion ------------------------

def prepare_params(irreps, affine_weight, affine_bias):
    dim, num_features, num_scalar, scalar_index, comp_feature = \
        irreps_metadata(irreps)
    smask = np.zeros((1, dim), np.float32)
    b_exp = np.zeros((1, dim), np.float32)
    if num_scalar > 0:
        smask[0, scalar_index] = 1.0
        b_exp[0, scalar_index] = np.asarray(affine_bias, np.float32)
    w_exp = np.asarray(affine_weight, np.float32)[comp_feature].reshape(1, dim)
    return jnp.asarray(smask), jnp.asarray(w_exp), jnp.asarray(b_exp)


# --------------------------- plain-JAX reference ----------------------------

def reference(x, irreps, weight, bias, eps=1e-5):
    N, D = x.shape
    dim, num_features, num_scalar, scalar_index, _ = irreps_metadata(irreps)
    s = x[:, scalar_index]
    mean = s.mean(axis=1, keepdims=True)
    x = x.at[:, scalar_index].add(-jnp.repeat(mean, num_scalar, axis=1))
    # Invariant(squared=True): per-irrep-copy squared norm
    sq, ix = [], 0
    for mul, l, p in irreps:
        d = 2 * l + 1
        blk = x[:, ix:ix + mul * d].reshape(N, mul, d)
        sq.append(jnp.sum(blk * blk, axis=-1))
        ix += mul * d
    sq = jnp.concatenate(sq, axis=1)                      # (N, num_features)
    inv_rms = 1.0 / jnp.sqrt(sq.mean(axis=1, keepdims=True) + eps)
    x = x * inv_rms
    # ElementwiseTensorProduct with num_features x 0e == per-copy scalar mul
    out, ix, f = [], 0, 0
    for mul, l, p in irreps:
        d = 2 * l + 1
        blk = (x[:, ix:ix + mul * d].reshape(N, mul, d)
               * weight[f:f + mul][None, :, None])
        out.append(blk.reshape(N, mul * d))
        ix += mul * d
        f += mul
    x = jnp.concatenate(out, axis=1)
    x = x.at[:, scalar_index].add(
        jnp.broadcast_to(bias[None, :], (N, num_scalar)))
    return x


# ----------------------------------- main ------------------------------------

if __name__ == "__main__":
    # irreps = "8x0e + 4x1o + 2x2e"  -> dim=30, num_features=14, num_scalar=8
    irreps = [(8, 0, 1), (4, 1, -1), (2, 2, 1)]
    eps = 1e-5

    dim, num_features, num_scalar, scalar_index, comp_feature = \
        irreps_metadata(irreps)

    key = jax.random.PRNGKey(0)
    k_x, k_w, k_b = jax.random.split(key, 3)

    # Non-trivial affine parameters (module init is ones/zeros; use random
    # values so the affine weight/bias paths are actually exercised).
    affine_weight = jax.random.uniform(
        k_w, (num_features,), jnp.float32, 0.5, 1.5)
    affine_bias = 0.1 * jax.random.normal(k_b, (num_scalar,), jnp.float32)

    smask, w_exp, b_exp = prepare_params(irreps, affine_weight, affine_bias)

    # deterministic small input; N=100 is deliberately ragged (not a multiple
    # of the 8-row sublane tile) to exercise the masked partial last block.
    N = 100
    x = jax.random.normal(k_x, (N, dim), dtype=jnp.float32)

    out = equivariant_layer_norm(
        x, smask, w_exp, b_exp,
        num_features=num_features, num_scalar=num_scalar, eps=eps)
    out = jax.block_until_ready(out)

    ref = reference(x, irreps, affine_weight, affine_bias, eps=eps)
    np.testing.assert_allclose(np.asarray(out), np.asarray(ref),
                               rtol=1e-5, atol=1e-5)

    print("KERNEL_OK")
</pallas_src>

<mosaic_0001>
module attributes {stable_mosaic.version = 11 : i64} {
  func.func @_eqln_kernel(%arg0: i32, %arg1: memref<56x30xf32, #tpu.memory_space<vmem>>, %arg2: memref<1x30xf32, #tpu.memory_space<vmem>>, %arg3: memref<1x30xf32, #tpu.memory_space<vmem>>, %arg4: memref<1x30xf32, #tpu.memory_space<vmem>>, %arg5: memref<56x30xf32, #tpu.memory_space<vmem>>) attributes {dimension_semantics = [#tpu.dimension_semantics<parallel>], iteration_bounds = array<i64: 2>, scalar_prefetch = 0 : i64, scratch_operands = 0 : i64, tpu.core_type = #tpu.core_type<tc>, window_params = [{transform_indices = @transform_0, window_bounds = array<i64: 56, 30>}, {pipeline_mode = #tpu.pipeline_mode<synchronous>, transform_indices = @transform_1, window_bounds = array<i64: 1, 30>}, {pipeline_mode = #tpu.pipeline_mode<synchronous>, transform_indices = @transform_2, window_bounds = array<i64: 1, 30>}, {pipeline_mode = #tpu.pipeline_mode<synchronous>, transform_indices = @transform_3, window_bounds = array<i64: 1, 30>}, {transform_indices = @transform_4, window_bounds = array<i64: 56, 30>}]} {
    %c0 = arith.constant 0 : index
    %c0_0 = arith.constant 0 : index
    %0 = vector.load %arg1[%c0, %c0_0] : memref<56x30xf32, #tpu.memory_space<vmem>>, vector<56x30xf32>
    %c0_1 = arith.constant 0 : index
    %c0_2 = arith.constant 0 : index
    %1 = vector.load %arg2[%c0_1, %c0_2] : memref<1x30xf32, #tpu.memory_space<vmem>>, vector<1x30xf32>
    %2 = vector.broadcast %1 : vector<1x30xf32> to vector<56x30xf32>
    %3 = arith.mulf %0, %2 : vector<56x30xf32>
    %cst = arith.constant dense<0.000000e+00> : vector<56xf32>
    %4 = vector.multi_reduction <add>, %3, %cst [1] : vector<56x30xf32> to vector<56xf32>
    %5 = vector.shape_cast %4 : vector<56xf32> to vector<56x1xf32>
    %6 = arith.mulf %0, %0 : vector<56x30xf32>
    %cst_3 = arith.constant dense<0.000000e+00> : vector<56xf32>
    %7 = vector.multi_reduction <add>, %6, %cst_3 [1] : vector<56x30xf32> to vector<56xf32>
    %8 = vector.shape_cast %7 : vector<56xf32> to vector<56x1xf32>
    %cst_4 = arith.constant 1.250000e-01 : f32
    %9 = vector.broadcast %cst_4 : f32 to vector<56x1xf32>
    %10 = arith.mulf %5, %9 : vector<56x1xf32>
    %11 = arith.mulf %10, %10 : vector<56x1xf32>
    %cst_5 = arith.constant 8.000000e+00 : f32
    %12 = vector.broadcast %cst_5 : f32 to vector<56x1xf32>
    %13 = arith.mulf %12, %11 : vector<56x1xf32>
    %14 = arith.subf %8, %13 : vector<56x1xf32>
    %cst_6 = arith.constant 0.0714285746 : f32
    %15 = vector.broadcast %cst_6 : f32 to vector<56x1xf32>
    %16 = arith.mulf %14, %15 : vector<56x1xf32>
    %cst_7 = arith.constant 9.99999974E-6 : f32
    %17 = vector.broadcast %cst_7 : f32 to vector<56x1xf32>
    %18 = arith.addf %16, %17 : vector<56x1xf32>
    %19 = math.rsqrt %18 : vector<56x1xf32>
    %20 = vector.broadcast %10 : vector<56x1xf32> to vector<56x30xf32>
    %21 = vector.broadcast %1 : vector<1x30xf32> to vector<56x30xf32>
    %22 = arith.mulf %20, %21 : vector<56x30xf32>
    %23 = arith.subf %0, %22 : vector<56x30xf32>
    %c0_8 = arith.constant 0 : index
    %c0_9 = arith.constant 0 : index
    %24 = vector.load %arg3[%c0_8, %c0_9] : memref<1x30xf32, #tpu.memory_space<vmem>>, vector<1x30xf32>
    %25 = vector.broadcast %19 : vector<56x1xf32> to vector<56x30xf32>
    %26 = vector.broadcast %24 : vector<1x30xf32> to vector<56x30xf32>
    %27 = arith.mulf %25, %26 : vector<56x30xf32>
    %28 = arith.mulf %23, %27 : vector<56x30xf32>
    %c0_10 = arith.constant 0 : index
    %c0_11 = arith.constant 0 : index
    %29 = vector.load %arg4[%c0_10, %c0_11] : memref<1x30xf32, #tpu.memory_space<vmem>>, vector<1x30xf32>
    %30 = vector.broadcast %29 : vector<1x30xf32> to vector<56x30xf32>
    %31 = arith.addf %28, %30 : vector<56x30xf32>
    %c0_12 = arith.constant 0 : index
    %c0_13 = arith.constant 0 : index
    %32 = vector.load %arg5[%c0_12, %c0_13] : memref<56x30xf32, #tpu.memory_space<vmem>>, vector<56x30xf32>
    tpu.vector_store %arg5[%c0_12, %c0_13], %31 {strides = array<i32>} : memref<56x30xf32, #tpu.memory_space<vmem>>, vector<56x30xf32>,
    return
  }
  func.func @transform_0(%arg0: i32) -> (i32, i32) {
    %c0_i32 = arith.constant 0 : i32
    %c0_i32_0 = arith.constant 0 : i32
    return %arg0, %c0_i32 : i32, i32
  }
  func.func @transform_1(%arg0: i32) -> (i32, i32) {
    %c0_i32 = arith.constant 0 : i32
    %c0_i32_0 = arith.constant 0 : i32
    %c0_i32_1 = arith.constant 0 : i32
    return %c0_i32, %c0_i32_0 : i32, i32
  }
  func.func @transform_2(%arg0: i32) -> (i32, i32) {
    %c0_i32 = arith.constant 0 : i32
    %c0_i32_0 = arith.constant 0 : i32
    %c0_i32_1 = arith.constant 0 : i32
    return %c0_i32, %c0_i32_0 : i32, i32
  }
  func.func @transform_3(%arg0: i32) -> (i32, i32) {
    %c0_i32 = arith.constant 0 : i32
    %c0_i32_0 = arith.constant 0 : i32
    %c0_i32_1 = arith.constant 0 : i32
    return %c0_i32, %c0_i32_0 : i32, i32
  }
  func.func @transform_4(%arg0: i32) -> (i32, i32) {
    %c0_i32 = arith.constant 0 : i32
    %c0_i32_0 = arith.constant 0 : i32
    return %arg0, %c0_i32 : i32, i32
  }
}

</mosaic_0001>

<llo_original>
// kernel: tpu_custom_call.1
$region0: #{tpu_custom_call.1}
  #allocation0 [shape = 'u32[]', space=smem, size = 0x4, offset = 0x4, fixed_abs, tag = 'smem constant byte address 0x4 - core index']
  #allocation1 [shape = 'u32[144,128]{1,0:T(1,128)}', space=vmem, size = 0x12000, scoped, tag = 'internal scratch']
  %s0 = inlined_call_operand.vmem [shape: f32[100,30], index: 0, kind: input, shape index: {}]
  %s1 = inlined_call_operand.vmem [shape: f32[1,30], index: 1, kind: input, shape index: {}]
  %s2 = inlined_call_operand.vmem [shape: f32[1,30], index: 2, kind: input, shape index: {}]
  %s3 = inlined_call_operand.vmem [shape: f32[1,30], index: 3, kind: input, shape index: {}]
  %s4 = inlined_call_operand.vmem [shape: f32[100,30], index: 4, kind: output, shape index: {}]
  %s5 = sld [smem:[#allocation0]]
  $region97: #{tpu_custom_call.1} parent=0
    _
  %s7 = ssub.s32 1, %s5
  %s8 = scalar_select 0, %s7, %s5
  $region1: #{tpu_custom_call.1} parent=0
    #allocation2 [shape = 'u8[57344]{0}', space=vmem, size = 0xe000, scoped, tag = 'output window, operand 0']
    loop: start=0, step=1, limit=4
    $region2: #{tpu_custom_call.1} parent=1 // loop_pre_header
      _
    $region3: #{tpu_custom_call.1} parent=1 // loop_header
      %s10 = sphi 0, %s14
      %p11 = scmp.ge.s32.totalorder %s10, 4
      %s20 = sphi 0, %s22
      %s23 = sphi 0, %s20
      %s24 = sphi 0, %s23
      %s40 = sphi 0, %s24
      %s44 = sphi 0, %s44
      %s46 = sphi 0, %s44
      %s47 = sphi 0, %s46
      %s61 = sphi 0, %s47
      %s65 = sphi 0, %s65
      %s67 = sphi 0, %s65
      %s68 = sphi 0, %s67
      %s82 = sphi 0, %s68
      %s86 = sphi 0, %s86
      %s88 = sphi 0, %s86
      %s89 = sphi 0, %s88
      %s103 = sphi 0, %s89
      %s109 = sphi 0, %s111
      %s112 = sphi 0, %s109
      %s113 = sphi 0, %s112
      %s129 = sphi 0, %s113
    $region4: #{tpu_custom_call.1} parent=1 // loop_header_branch
      %13 = sbr.rel (%p11) target = $region8
    $region5: #{tpu_custom_call.1} parent=1 // loop_body
      %s15 = ssub.s32 %s10, 1
      %s16 = ssub.s32 %s10, 2
      %s17 = sadd.s32 %s10, 1
      %s18 = ssub.s32 %s10, %s17
      %p19 = scmp.eq.s32.totalorder %s18, 0
      %s21 = sadd.s32 %s20, 1
      %s22 = scalar_select %p19, %s20, %s21
      %p25 = pneg %p19
      %p26 = scmp.eq.s32.totalorder %s10, 1
      %p27 = por %p25, %p26
      %p28 = scmp.ne.s32.totalorder %s20, %s23
      %p29 = scmp.eq.s32.totalorder %s10, 0
      %p30 = por %p28, %p29
      %p31 = scmp.ne.s32.totalorder %s20, %s23
      %p32 = scmp.eq.s32.totalorder %s15, 1
      %p33 = por %p31, %p32
      %p34 = scmp.ne.s32.totalorder %s23, %s24
      %p35 = scmp.eq.s32.totalorder %s15, 0
      %p36 = por %p34, %p35
      %p37 = scmp.ne.s32.totalorder %s23, %s24
      %p38 = scmp.eq.s32.totalorder %s16, 1
      %p39 = por %p37, %p38
      %p41 = scmp.ne.s32.totalorder %s24, %s40
      %p42 = scmp.eq.s32.totalorder %s16, 0
      %p43 = por %p41, %p42
      %s45 = sadd.s32 %s44, 1
      %p48 = scmp.eq.s32.totalorder %s10, 1
      %p49 = scmp.ne.s32.totalorder %s44, %s46
      %p50 = scmp.eq.s32.totalorder %s10, 0
      %p51 = por %p49, %p50
      %p52 = scmp.ne.s32.totalorder %s44, %s46
      %p53 = scmp.eq.s32.totalorder %s15, 1
      %p54 = por %p52, %p53
      %p55 = scmp.ne.s32.totalorder %s46, %s47
      %p56 = scmp.eq.s32.totalorder %s15, 0
      %p57 = por %p55, %p56
      %p58 = scmp.ne.s32.totalorder %s46, %s47
      %p59 = scmp.eq.s32.totalorder %s16, 1
      %p60 = por %p58, %p59
      %p62 = scmp.ne.s32.totalorder %s47, %s61
      %p63 = scmp.eq.s32.totalorder %s16, 0
      %p64 = por %p62, %p63
      %s66 = sadd.s32 %s65, 1
      %p69 = scmp.eq.s32.totalorder %s10, 1
      %p70 = scmp.ne.s32.totalorder %s65, %s67
      %p71 = scmp.eq.s32.totalorder %s10, 0
      %p72 = por %p70, %p71
      %p73 = scmp.ne.s32.totalorder %s65, %s67
      %p74 = scmp.eq.s32.totalorder %s15, 1
      %p75 = por %p73, %p74
      %p76 = scmp.ne.s32.totalorder %s67, %s68
      %p77 = scmp.eq.s32.totalorder %s15, 0
      %p78 = por %p76, %p77
      %p79 = scmp.ne.s32.totalorder %s67, %s68
      %p80 = scmp.eq.s32.totalorder %s16, 1
      %p81 = por %p79, %p80
      %p83 = scmp.ne.s32.totalorder %s68, %s82
      %p84 = scmp.eq.s32.totalorder %s16, 0
      %p85 = por %p83, %p84
      %s87 = sadd.s32 %s86, 1
      %p90 = scmp.eq.s32.totalorder %s10, 1
      %p91 = scmp.ne.s32.totalorder %s86, %s88
      %p92 = scmp.eq.s32.totalorder %s10, 0
      %p93 = por %p91, %p92
      %p94 = scmp.ne.s32.totalorder %s86, %s88
      %p95 = scmp.eq.s32.totalorder %s15, 1
      %p96 = por %p94, %p95
      %p97 = scmp.ne.s32.totalorder %s88, %s89
      %p98 = scmp.eq.s32.totalorder %s15, 0
      %p99 = por %p97, %p98
      %p100 = scmp.ne.s32.totalorder %s88, %s89
      %p101 = scmp.eq.s32.totalorder %s16, 1
      %p102 = por %p100, %p101
      %p104 = scmp.ne.s32.totalorder %s89, %s103
      %p105 = scmp.eq.s32.totalorder %s16, 0
      %p106 = por %p104, %p105
      %s107 = ssub.s32 %s10, %s17
      %p108 = scmp.eq.s32.totalorder %s107, 0
      %s110 = sadd.s32 %s109, 1
      %s111 = scalar_select %p108, %s109, %s110
      %p114 = pneg %p108
      %p115 = scmp.eq.s32.totalorder %s10, 1
      %p116 = por %p114, %p115
      %p117 = scmp.ne.s32.totalorder %s109, %s112
      %p118 = scmp.eq.s32.totalorder %s10, 0
      %p119 = por %p117, %p118
      %p120 = scmp.ne.s32.totalorder %s109, %s112
      %p121 = scmp.eq.s32.totalorder %s15, 1
      %p122 = por %p120, %p121
      %p123 = scmp.ne.s32.totalorder %s112, %s113
      %p124 = scmp.eq.s32.totalorder %s15, 0
      %p125 = por %p123, %p124
      %p126 = scmp.ne.s32.totalorder %s112, %s113
      %p127 = scmp.eq.s32.totalorder %s16, 1
      %p128 = por %p126, %p127
      %p130 = scmp.ne.s32.totalorder %s113, %s129
      %p131 = scmp.eq.s32.totalorder %s16, 0
      %p132 = por %p130, %p131
      %p133 = scmp.le.s32.totalorder 1, %s10
      %p134 = scmp.lt.s32.totalorder %s10, 3
      %p135 = pnand %p133, %p134
      %p136 = pneg %p135
      // Predicated region
      $region9: #{tpu_custom_call.1} parent=5 // pred_check
        _
      $region10: #{tpu_custom_call.1} parent=5 // pred_check_branch
        %138 = sbr.rel (%p135) target = $region12
      $region11: #{tpu_custom_call.1} parent=5 // pred_region
        %s139 = ssub.s32 %s10, 1
        // Predicated region
        $region13: #{tpu_custom_call.1} parent=11 // pred_check
          %p140 = pneg %p57
        $region14: #{tpu_custom_call.1} parent=11 // pred_check_branch
          %142 = sbr.rel (%p140) target = $region16
        $region15: #{tpu_custom_call.1} parent=11 // pred_region
          _
        $region16: #{tpu_custom_call.1} parent=11 // pred_fallthru
          _
        // Predicated region
        $region17: #{tpu_custom_call.1} parent=11 // pred_check
          %p143 = pneg %p78
        $region18: #{tpu_custom_call.1} parent=11 // pred_check_branch
          %145 = sbr.rel (%p143) target = $region20
        $region19: #{tpu_custom_call.1} parent=11 // pred_region
          _
        $region20: #{tpu_custom_call.1} parent=11 // pred_fallthru
          _
        // Predicated region
        $region21: #{tpu_custom_call.1} parent=11 // pred_check
          %p146 = pneg %p99
        $region22: #{tpu_custom_call.1} parent=11 // pred_check_branch
          %148 = sbr.rel (%p146) target = $region24
        $region23: #{tpu_custom_call.1} parent=11 // pred_region
          _
        $region24: #{tpu_custom_call.1} parent=11 // pred_fallthru
          _
      $region12: #{tpu_custom_call.1} parent=5 // pred_fallthru
        _
      %p149 = scmp.lt.s32.totalorder %s10, 2
      // Predicated region
      $region25: #{tpu_custom_call.1} parent=5 // pred_check
        %p150 = pneg %p149
      $region26: #{tpu_custom_call.1} parent=5 // pred_check_branch
        %152 = sbr.rel (%p150) target = $region28
      $region27: #{tpu_custom_call.1} parent=5 // pred_region
        // Predicated region
        $region29: #{tpu_custom_call.1} parent=27 // pred_check
          %p153 = pneg %p30
        $region30: #{tpu_custom_call.1} parent=27 // pred_check_branch
          %155 = sbr.rel (%p153) target = $region32
        $region31: #{tpu_custom_call.1} parent=27 // pred_region
          %s156 = smul.u32 7, %s10
          %s157 = ssub.s32 13, %s156
          %p158 = scmp.lt.s32.totalorder %s157, 7
          %s159 = scalar_select %p158, %s157, 7
          %s160 = smul.u32 128, %s159
          %p161 = scmp.lt.s32.totalorder %s156, 12
          %s162 = scalar_select %p161, %s156, 12
          %s163 = smul.addr %s162, 8
          %s164 = scalar_lea.vmem %s0, %s163
          %s165 = smul.u32 7, %s10
          %s166 = ssub.s32 13, %s165
          %p167 = scmp.lt.s32.totalorder %s166, 7
          %s168 = scalar_select %p167, %s166, 7
          %s169 = smul.u32 128, %s168
        $region32: #{tpu_custom_call.1} parent=27 // pred_fallthru
          _
      $region28: #{tpu_custom_call.1} parent=5 // pred_fallthru
        _
      %p170 = scmp.le.s32.totalorder 1, %s10
      %p171 = scmp.lt.s32.totalorder %s10, 3
      %p172 = pnand %p170, %p171
      %p173 = pneg %p172
      // Predicated region
      $region33: #{tpu_custom_call.1} parent=5 // pred_check
        _
      $region34: #{tpu_custom_call.1} parent=5 // pred_check_branch
        %175 = sbr.rel (%p172) target = $region36
      $region35: #{tpu_custom_call.1} parent=5 // pred_region
        %s176 = ssub.s32 %s10, 1
        %s177 = smul.u32 7, %s15
        %s178 = ssub.s32 13, %s177
        %p179 = scmp.lt.s32.totalorder %s178, 7
        %s180 = scalar_select %p179, %s178, 7
        %s181 = smul.u32 128, %s180
        %p182 = scmp.lt.s32.totalorder %s177, 12
        %s183 = scalar_select %p182, %s177, 12
        %s184 = smul.addr %s183, 8
        %s185 = scalar_lea.vmem %s0, %s184
        %p186 = pneg %p36
        %p187 = pneg %p33
        %p188 = pneg %p57
        %p189 = pneg %p54
        %p190 = pneg %p78
        %p191 = pneg %p75
        %p192 = pneg %p99
        %p193 = pneg %p96
        %p194 = pneg %p125
        %p195 = pneg %p122
        %s196 = sand.u32 %s112, 1
        %s197 = sand.u32 %s112, 1
        %s198 = smul.addr %s197, 56
        %s199 = scalar_lea.vmem [#allocation2], %s198
        %s200 = smul.u32 7, %s15
        %s201 = ssub.s32 13, %s200
        %p202 = scmp.lt.s32.totalorder %s201, 7
        %s203 = scalar_select %p202, %s201, 7
        %s204 = smul.u32 128, %s203
        %p205 = scmp.lt.s32.totalorder %s200, 12
        %s206 = scalar_select %p205, %s200, 12
        %s207 = smul.addr %s206, 8
        %s208 = scalar_lea.vmem %s0, %s207
        %s209 = smul.u32 7, %s15
        %s210 = ssub.s32 13, %s209
        %p211 = scmp.lt.s32.totalorder %s210, 7
        %s212 = scalar_select %p211, %s210, 7
        %s213 = smul.u32 128, %s212
        %s214 = smul.u32 7, %s15
        %s215 = ssub.s32 13, %s214
        %p216 = scmp.lt.s32.totalorder %s215, 7
        %s217 = scalar_select %p216, %s215, 7
        %s218 = smul.u32 128, %s217
        %v219 = vld [vmem:[%s208] sm:$0xff]
        %v220 = vld [vmem:[%s208 + $0x8] sm:$0xff]
        %v221 = vld [vmem:[%s208 + $0x10] sm:$0xff]
        %v222 = vld [vmem:[%s208 + $0x18] sm:$0xff]
        %v223 = vld [vmem:[%s208 + $0x20] sm:$0xff]
        %v224 = vld [vmem:[%s208 + $0x28] sm:$0xff]
        %v225 = vld [vmem:[%s208 + $0x30] sm:$0xff]
        %v226 = vld [vmem:[%s1] sm:$0x1]
        %v228 = vlaneseq
        %v229 = vshrl.u32 %v228, 7
        %v230 = vsub.s32 0, %v229
        %v231 = vrot.slane %v226, %v230
        %v233 = vmul.f32 %v219, %v231
        %v234 = vmul.f32 %v220, %v231
        %v235 = vmul.f32 %v221, %v231
        %v236 = vmul.f32 %v222, %v231
        %v237 = vmul.f32 %v223, %v231
        %v238 = vmul.f32 %v224, %v231
        %v239 = vmul.f32 %v225, %v231
        %vm240 = vcmask 244736
        %v241 = vsel %vm240, %v233, 0.0
        %242 = vadd.xlane.f32.xlu0 %v241
        %v243 = vpop.xlane.xlu0 %242
        %v244 = vsel %vm240, %v234, 0.0
        %245 = vadd.xlane.f32.xlu0 %v244
        %v246 = vpop.xlane.xlu0 %245
        %v247 = vsel %vm240, %v235, 0.0
        %248 = vadd.xlane.f32.xlu0 %v247
        %v249 = vpop.xlane.xlu0 %248
        %v250 = vsel %vm240, %v236, 0.0
        %251 = vadd.xlane.f32.xlu0 %v250
        %v252 = vpop.xlane.xlu0 %251
        %v253 = vsel %vm240, %v237, 0.0
        %254 = vadd.xlane.f32.xlu0 %v253
        %v255 = vpop.xlane.xlu0 %254
        %v256 = vsel %vm240, %v238, 0.0
        %257 = vadd.xlane.f32.xlu0 %v256
        %v258 = vpop.xlane.xlu0 %257
        %v259 = vsel %vm240, %v239, 0.0
        %260 = vadd.xlane.f32.xlu0 %v259
        %v261 = vpop.xlane.xlu0 %260
        %v262 = vmul.f32 %v219, %v219
        %v263 = vmul.f32 %v220, %v220
        %v264 = vmul.f32 %v221, %v221
        %v265 = vmul.f32 %v222, %v222
        %v266 = vmul.f32 %v223, %v223
        %v267 = vmul.f32 %v224, %v224
        %v268 = vmul.f32 %v225, %v225
        %v269 = vsel %vm240, %v262, 0.0
        %270 = vadd.xlane.f32.xlu0 %v269
        %v271 = vpop.xlane.xlu0 %270
        %v272 = vsel %vm240, %v263, 0.0
        %273 = vadd.xlane.f32.xlu0 %v272
        %v274 = vpop.xlane.xlu0 %273
        %v275 = vsel %vm240, %v264, 0.0
        %276 = vadd.xlane.f32.xlu0 %v275
        %v277 = vpop.xlane.xlu0 %276
        %v278 = vsel %vm240, %v265, 0.0
        %279 = vadd.xlane.f32.xlu0 %v278
        %v280 = vpop.xlane.xlu0 %279
        %v281 = vsel %vm240, %v266, 0.0
        %282 = vadd.xlane.f32.xlu0 %v281
        %v283 = vpop.xlane.xlu0 %282
        %v284 = vsel %vm240, %v267, 0.0
        %285 = vadd.xlane.f32.xlu0 %v284
        %v286 = vpop.xlane.xlu0 %285
        %v287 = vsel %vm240, %v268, 0.0
        %288 = vadd.xlane.f32.xlu0 %v287
        %v289 = vpop.xlane.xlu0 %288
        %v290 = vmul.f32 %v243, 0.125
        %v291 = vmul.f32 %v246, 0.125
        %v292 = vmul.f32 %v249, 0.125
        %v293 = vmul.f32 %v252, 0.125
        %v294 = vmul.f32 %v255, 0.125
        %v295 = vmul.f32 %v258, 0.125
        %v296 = vmul.f32 %v261, 0.125
        %v297 = vmul.f32 %v290, %v290
        %v298 = vmul.f32 %v291, %v291
        %v299 = vmul.f32 %v292, %v292
        %v300 = vmul.f32 %v293, %v293
        %v301 = vmul.f32 %v294, %v294
        %v302 = vmul.f32 %v295, %v295
        %v303 = vmul.f32 %v296, %v296
        %v304 = vmul.f32 %v297, 8.0
        %v305 = vmul.f32 %v298, 8.0
        %v306 = vmul.f32 %v299, 8.0
        %v307 = vmul.f32 %v300, 8.0
        %v308 = vmul.f32 %v301, 8.0
        %v309 = vmul.f32 %v302, 8.0
        %v310 = vmul.f32 %v303, 8.0
        %v311 = vsub.f32 %v271, %v304
        %v312 = vsub.f32 %v274, %v305
        %v313 = vsub.f32 %v277, %v306
        %v314 = vsub.f32 %v280, %v307
        %v315 = vsub.f32 %v283, %v308
        %v316 = vsub.f32 %v286, %v309
        %v317 = vsub.f32 %v289, %v310
        %v318 = vmul.f32 %v311, 0.071428575
        %v319 = vmul.f32 %v312, 0.071428575
        %v320 = vmul.f32 %v313, 0.071428575
        %v321 = vmul.f32 %v314, 0.071428575
        %v322 = vmul.f32 %v315, 0.071428575
        %v323 = vmul.f32 %v316, 0.071428575
        %v324 = vmul.f32 %v317, 0.071428575
        %v325 = vadd.f32 %v318, 1e-05
        %v326 = vadd.f32 %v319, 1e-05
        %v327 = vadd.f32 %v320, 1e-05
        %v328 = vadd.f32 %v321, 1e-05
        %v329 = vadd.f32 %v322, 1e-05
        %v330 = vadd.f32 %v323, 1e-05
        %v331 = vadd.f32 %v324, 1e-05
        %v332 = vrsqrt.pop %v325
        %v333 = vrsqrt.pop %v326
        %v334 = vrsqrt.pop %v327
        %v335 = vrsqrt.pop %v328
        %v336 = vrsqrt.pop %v329
        %v337 = vrsqrt.pop %v330
        %v338 = vrsqrt.pop %v331
        %v339 = vmul.f32 %v290, %v231
        %v340 = vmul.f32 %v291, %v231
        %v341 = vmul.f32 %v292, %v231
        %v342 = vmul.f32 %v293, %v231
        %v343 = vmul.f32 %v294, %v231
        %v344 = vmul.f32 %v295, %v231
        %v345 = vmul.f32 %v296, %v231
        %v346 = vsub.f32 %v219, %v339
        %v347 = vsub.f32 %v220, %v340
        %v348 = vsub.f32 %v221, %v341
        %v349 = vsub.f32 %v222, %v342
        %v350 = vsub.f32 %v223, %v343
        %v351 = vsub.f32 %v224, %v344
        %v352 = vsub.f32 %v225, %v345
        %v353 = vld [vmem:[%s2] sm:$0x1]
        %v355 = vlaneseq
        %v356 = vshrl.u32 %v355, 7
        %v357 = vsub.s32 0, %v356
        %v358 = vrot.slane %v353, %v357
        %v360 = vmul.f32 %v332, %v358
        %v361 = vmul.f32 %v333, %v358
        %v362 = vmul.f32 %v334, %v358
        %v363 = vmul.f32 %v335, %v358
        %v364 = vmul.f32 %v336, %v358
        %v365 = vmul.f32 %v337, %v358
        %v366 = vmul.f32 %v338, %v358
        %v367 = vmul.f32 %v346, %v360
        %v368 = vmul.f32 %v347, %v361
        %v369 = vmul.f32 %v348, %v362
        %v370 = vmul.f32 %v349, %v363
        %v371 = vmul.f32 %v350, %v364
        %v372 = vmul.f32 %v351, %v365
        %v373 = vmul.f32 %v352, %v366
        %v374 = vld [vmem:[%s3] sm:$0x1]
        %v376 = vlaneseq
        %v377 = vshrl.u32 %v376, 7
        %v378 = vsub.s32 0, %v377
        %v379 = vrot.slane %v374, %v378
        %v381 = vadd.f32 %v367, %v379
        %v382 = vadd.f32 %v368, %v379
        %v383 = vadd.f32 %v369, %v379
        %v384 = vadd.f32 %v370, %v379
        %v385 = vadd.f32 %v371, %v379
        %v386 = vadd.f32 %v372, %v379
        %v387 = vadd.f32 %v373, %v379
        %388 = vst.msk [vmem:[%s199] sm:$0xff] %vm240, %v381
        %389 = vst.msk [vmem:[%s199 + $0x8] sm:$0xff] %vm240, %v382
        %390 = vst.msk [vmem:[%s199 + $0x10] sm:$0xff] %vm240, %v383
        %391 = vst.msk [vmem:[%s199 + $0x18] sm:$0xff] %vm240, %v384
        %392 = vst.msk [vmem:[%s199 + $0x20] sm:$0xff] %vm240, %v385
        %393 = vst.msk [vmem:[%s199 + $0x28] sm:$0xff] %vm240, %v386
        %394 = vst.msk [vmem:[%s199 + $0x30] sm:$0xff] %vm240, %v387
        %s395 = sand.u32 %s112, 1
        %s396 = sand.u32 %s112, 1
        %s397 = smul.addr %s396, 56
        %s398 = scalar_lea.vmem [#allocation2], %s397
        // Predicated region
        $region37: #{tpu_custom_call.1} parent=35 // pred_check
          %p399 = pneg %p122
        $region38: #{tpu_custom_call.1} parent=35 // pred_check_branch
          %401 = sbr.rel (%p399) target = $region40
        $region39: #{tpu_custom_call.1} parent=35 // pred_region
          %s402 = smul.u32 7, %s15
          %s403 = ssub.s32 13, %s402
          %p404 = scmp.lt.s32.totalorder %s403, 7
          %s405 = scalar_select %p404, %s403, 7
          %s406 = smul.u32 128, %s405
          %p407 = scmp.ne.s32.totalorder 0, %s406
          %s408 = smul.addr %s402, 8
          %s409 = scalar_lea.vmem %s4, %s408
          // Predicated region
          $region41: #{tpu_custom_call.1} parent=39 // pred_check
            %p410 = pneg %p407
          $region42: #{tpu_custom_call.1} parent=39 // pred_check_branch
            %412 = sbr.rel (%p410) target = $region44
          $region43: #{tpu_custom_call.1} parent=39 // pred_region
            // Predicated region
            $region45: #{tpu_custom_call.1} parent=43 // pred_check
              _
            $region46: #{tpu_custom_call.1} parent=43 // pred_check_branch
              %414 = sbr.rel (0) target = $region48
            $region47: #{tpu_custom_call.1} parent=43 // pred_region
              // Predicated region
              $region67: #{tpu_custom_call.1} parent=47 // pred_check
                _
              $region68: #{tpu_custom_call.1} parent=47 // pred_check_branch
                %477 = sbr.rel (0) target = $region70
              $region69: #{tpu_custom_call.1} parent=47 // pred_region
                %s478 = sdiv.u32.pop %s405, 7
                %s479 = srem.u32.pop %s405, 7
                // While loop
                $region71: #{tpu_custom_call.1} parent=69 // loop_pre_header
                  _
                $region72: #{tpu_custom_call.1} parent=69 // loop_header
                  %s481 = sphi 0, %s483
                  %p482 = scmp.ge.s32.totalorder %s481, %s478
                  %s486 = sphi 0, %s505
                  %s487 = sphi %s398, %s508
                  %s488 = sphi %s409, %s509
                $region73: #{tpu_custom_call.1} parent=69 // loop_header_branch
                  %485 = sbr.rel (%p482) target = $region77
                $region74: #{tpu_custom_call.1} parent=69 // loop_body
                  %v489 = vld [vmem:[%s487] sm:$0xff]
                  %490 = vst [vmem:[%s488] sm:$0xff] %v489
                  %v491 = vld [vmem:[%s487 + $0x8] sm:$0xff]
                  %492 = vst [vmem:[%s488 + $0x8] sm:$0xff] %v491
                  %v493 = vld [vmem:[%s487 + $0x10] sm:$0xff]
                  %494 = vst [vmem:[%s488 + $0x10] sm:$0xff] %v493
                  %v495 = vld [vmem:[%s487 + $0x18] sm:$0xff]
                  %496 = vst [vmem:[%s488 + $0x18] sm:$0xff] %v495
                  %v497 = vld [vmem:[%s487 + $0x20] sm:$0xff]
                  %498 = vst [vmem:[%s488 + $0x20] sm:$0xff] %v497
                  %v499 = vld [vmem:[%s487 + $0x28] sm:$0xff]
                  %500 = vst [vmem:[%s488 + $0x28] sm:$0xff] %v499
                  %v501 = vld [vmem:[%s487 + $0x30] sm:$0xff]
                  %502 = vst [vmem:[%s488 + $0x30] sm:$0xff] %v501
                  %s503 = sadd.s32 1, %s486
                  %p504 = scmp.ge.s32.totalorder %s503, %s478
                  %s505 = scalar_select %p504, 0, %s503
                  %s506 = smul.u32 %s505, 56
                  %s507 = smul.u32 %s505, 56
                  %s508 = scalar_lea.vmem %s398, %s506 [#allocation2]
                  %s509 = scalar_lea.vmem %s409, %s507
                $region75: #{tpu_custom_call.1} parent=69 // loop_footer
                  %s483 = sadd.s32 %s481, 1
                $region76: #{tpu_custom_call.1} parent=69 // loop_footer_branch
                  %480 = sbr.rel target = $region72
                $region77: #{tpu_custom_call.1} parent=69 // loop_exit
                  _
                %s510 = sdiv.u32.pop %s405, 7
                %s511 = srem.u32.pop %s405, 7
                %s512 = smul.u32 %s510, 7
                %s513 = smul.u32 8, %s512
                %s514 = scalar_lea.vmem %s398, %s513 [#allocation2]
                %s515 = smul.u32 8, %s512
                %s516 = scalar_lea.vmem %s409, %s515
                // While loop
                $region78: #{tpu_custom_call.1} parent=69 // loop_pre_header
                  _
                $region79: #{tpu_custom_call.1} parent=69 // loop_header
                  %s518 = sphi 0, %s520
                  %p519 = scmp.ge.s32.totalorder %s518, %s511
                  %s523 = sphi 0, %s530
                  %s524 = sphi %s514, %s533
                  %s525 = sphi %s516, %s534
                $region80: #{tpu_custom_call.1} parent=69 // loop_header_branch
                  %522 = sbr.rel (%p519) target = $region84
                $region81: #{tpu_custom_call.1} parent=69 // loop_body
                  %v526 = vld [vmem:[%s524] sm:$0xff]
                  %527 = vst [vmem:[%s525] sm:$0xff] %v526
                  %s528 = sadd.s32 1, %s523
                  %p529 = scmp.ge.s32.totalorder %s528, %s511
                  %s530 = scalar_select %p529, 0, %s528
                  %s531 = smul.u32 %s530, 8
                  %s532 = smul.u32 %s530, 8
                  %s533 = scalar_lea.vmem %s514, %s531 [#allocation2]
                  %s534 = scalar_lea.vmem %s516, %s532
                $region82: #{tpu_custom_call.1} parent=69 // loop_footer
                  %s520 = sadd.s32 %s518, 1
                $region83: #{tpu_custom_call.1} parent=69 // loop_footer_branch
                  %517 = sbr.rel target = $region79
                $region84: #{tpu_custom_call.1} parent=69 // loop_exit
                  _
              $region70: #{tpu_custom_call.1} parent=47 // pred_fallthru
                _
              // Predicated region
              $region85: #{tpu_custom_call.1} parent=47 // pred_check
                _
              $region86: #{tpu_custom_call.1} parent=47 // pred_check_branch
                %536 = sbr.rel target = $region88
              $region87: #{tpu_custom_call.1} parent=47 // pred_region
                _
              $region88: #{tpu_custom_call.1} parent=47 // pred_fallthru
                _
            $region48: #{tpu_custom_call.1} parent=43 // pred_fallthru
              _
            // Predicated region
            $region49: #{tpu_custom_call.1} parent=43 // pred_check
              _
            $region50: #{tpu_custom_call.1} parent=43 // pred_check_branch
              %416 = sbr.rel target = $region52
            $region51: #{tpu_custom_call.1} parent=43 // pred_region
              %s418 = ssub.s32 256, 1
              %s419 = sdiv.u32.pop %s405, 7
              %s420 = srem.u32.pop %s405, 7
              // While loop
              $region53: #{tpu_custom_call.1} parent=51 // loop_pre_header
                _
              $region54: #{tpu_custom_call.1} parent=51 // loop_header
                %s422 = sphi 0, %s424
                %p423 = scmp.ge.s32.totalorder %s422, %s419
                %s427 = sphi 0, %s446
                %s428 = sphi %s398, %s449
                %s429 = sphi %s409, %s450
              $region55: #{tpu_custom_call.1} parent=51 // loop_header_branch
                %426 = sbr.rel (%p423) target = $region59
              $region56: #{tpu_custom_call.1} parent=51 // loop_body
                %v430 = vld [vmem:[%s428] sm:%s418]
                %431 = vst [vmem:[%s429] sm:%s418] %v430
                %v432 = vld [vmem:[%s428 + $0x8] sm:%s418]
                %433 = vst [vmem:[%s429 + $0x8] sm:%s418] %v432
                %v434 = vld [vmem:[%s428 + $0x10] sm:%s418]
                %435 = vst [vmem:[%s429 + $0x10] sm:%s418] %v434
                %v436 = vld [vmem:[%s428 + $0x18] sm:%s418]
                %437 = vst [vmem:[%s429 + $0x18] sm:%s418] %v436
                %v438 = vld [vmem:[%s428 + $0x20] sm:%s418]
                %439 = vst [vmem:[%s429 + $0x20] sm:%s418] %v438
                %v440 = vld [vmem:[%s428 + $0x28] sm:%s418]
                %441 = vst [vmem:[%s429 + $0x28] sm:%s418] %v440
                %v442 = vld [vmem:[%s428 + $0x30] sm:%s418]
                %443 = vst [vmem:[%s429 + $0x30] sm:%s418] %v442
                %s444 = sadd.s32 1, %s427
                %p445 = scmp.ge.s32.totalorder %s444, %s419
                %s446 = scalar_select %p445, 0, %s444
                %s447 = smul.u32 %s446, 56
                %s448 = smul.u32 %s446, 56
                %s449 = scalar_lea.vmem %s398, %s447 [#allocation2]
                %s450 = scalar_lea.vmem %s409, %s448
              $region57: #{tpu_custom_call.1} parent=51 // loop_footer
                %s424 = sadd.s32 %s422, 1
              $region58: #{tpu_custom_call.1} parent=51 // loop_footer_branch
                %421 = sbr.rel target = $region54
              $region59: #{tpu_custom_call.1} parent=51 // loop_exit
                _
              %s451 = sdiv.u32.pop %s405, 7
              %s452 = srem.u32.pop %s405, 7
              %s453 = smul.u32 %s451, 7
              %s454 = smul.u32 8, %s453
              %s455 = scalar_lea.vmem %s398, %s454 [#allocation2]
              %s456 = smul.u32 8, %s453
              %s457 = scalar_lea.vmem %s409, %s456
              // While loop
              $region60: #{tpu_custom_call.1} parent=51 // loop_pre_header
                _
              $region61: #{tpu_custom_call.1} parent=51 // loop_header
                %s459 = sphi 0, %s461
                %p460 = scmp.ge.s32.totalorder %s459, %s452
                %s464 = sphi 0, %s471
                %s465 = sphi %s455, %s474
                %s466 = sphi %s457, %s475
              $region62: #{tpu_custom_call.1} parent=51 // loop_header_branch
                %463 = sbr.rel (%p460) target = $region66
              $region63: #{tpu_custom_call.1} parent=51 // loop_body
                %v467 = vld [vmem:[%s465] sm:%s418]
                %468 = vst [vmem:[%s466] sm:%s418] %v467
                %s469 = sadd.s32 1, %s464
                %p470 = scmp.ge.s32.totalorder %s469, %s452
                %s471 = scalar_select %p470, 0, %s469
                %s472 = smul.u32 %s471, 8
                %s473 = smul.u32 %s471, 8
                %s474 = scalar_lea.vmem %s455, %s472 [#allocation2]
                %s475 = scalar_lea.vmem %s457, %s473
              $region64: #{tpu_custom_call.1} parent=51 // loop_footer
                %s461 = sadd.s32 %s459, 1
              $region65: #{tpu_custom_call.1} parent=51 // loop_footer_branch
                %458 = sbr.rel target = $region61
              $region66: #{tpu_custom_call.1} parent=51 // loop_exit
                _
            $region52: #{tpu_custom_call.1} parent=43 // pred_fallthru
              _
          $region44: #{tpu_custom_call.1} parent=39 // pred_fallthru
            _
          %537 = vnop
        $region40: #{tpu_custom_call.1} parent=35 // pred_fallthru
          _
      $region36: #{tpu_custom_call.1} parent=5 // pred_fallthru
        _
      %p538 = scmp.le.s32.totalorder 2, %s10
      // Predicated region
      $region89: #{tpu_custom_call.1} parent=5 // pred_check
        %p539 = pneg %p538
      $region90: #{tpu_custom_call.1} parent=5 // pred_check_branch
        %541 = sbr.rel (%p539) target = $region92
      $region91: #{tpu_custom_call.1} parent=5 // pred_region
        %s542 = ssub.s32 %s10, 2
        // Predicated region
        $region93: #{tpu_custom_call.1} parent=91 // pred_check
          %p543 = pneg %p128
        $region94: #{tpu_custom_call.1} parent=91 // pred_check_branch
          %545 = sbr.rel (%p543) target = $region96
        $region95: #{tpu_custom_call.1} parent=91 // pred_region
          %s546 = sand.u32 %s113, 1
          %s547 = sand.u32 %s113, 1
          %s548 = smul.addr %s547, 56
          %s549 = scalar_lea.vmem [#allocation2], %s548
        $region96: #{tpu_custom_call.1} parent=91 // pred_fallthru
          _
      $region92: #{tpu_custom_call.1} parent=5 // pred_fallthru
        _
    $region6: #{tpu_custom_call.1} parent=1 // loop_footer
      %s14 = sadd.s32 1, %s10
    $region7: #{tpu_custom_call.1} parent=1 // loop_footer_branch
      %9 = sbr.rel target = $region3
    $region8: #{tpu_custom_call.1} parent=1 // loop_exit
      _

</llo_original>
